<compile_context>
chip_gen: v5e
topology: v5e:2x2
jax: 0.10.0
libtpu: 0.0.40
codegen_flags: <defaults>
</compile_context>

<pallas_src>
import functools

import numpy as np
import jax
import jax.numpy as jnp
from jax import lax
from jax.experimental import pallas as pl
from jax.experimental.pallas import tpu as pltpu


# ---------------------------------------------------------------------------
# One-time probe: does pltpu.roll follow jnp.roll's sign convention?
# (out[i] = in[(i - shift) mod n]).  Guards the W-shift direction.
# ---------------------------------------------------------------------------
_ROLL_LIKE_JNP = None


def _roll_matches_jnp_roll():
    global _ROLL_LIKE_JNP
    if _ROLL_LIKE_JNP is None:
        def probe(x_ref, o_ref):
            o_ref[...] = pltpu.roll(x_ref[...], shift=1, axis=1)

        x = jax.lax.broadcasted_iota(jnp.float32, (8, 128), 1)
        out = pl.pallas_call(
            probe, out_shape=jax.ShapeDtypeStruct((8, 128), jnp.float32))(x)
        _ROLL_LIKE_JNP = bool(out[0, 0] == 127.0)
    return _ROLL_LIKE_JNP


# ---------------------------------------------------------------------------
# Kernel
# ---------------------------------------------------------------------------
def _msm_kernel(x_ref, w3dw_ref, w5dw_ref, wbig_ref, out_ref, *,
                H, W, OFF, LQ, roll_like_jnp):
    # x_ref    : (R, H*W)          R = B_blk*Cin, spatial on lanes
    # w3dw_ref : (R, 9)            depthwise dilated-3x3 taps, tiled per image
    # w5dw_ref : (R, 25)           depthwise dilated-5x5 taps, tiled per image
    # wbig_ref : (B_blk*Cout, 3R+8) block-diag fused pointwise weight + bias col
    # out_ref  : (B_blk*Cout, H*W)
    R = x_ref.shape[0]
    HW = H * W

    x_all = x_ref[...].astype(jnp.float32)                       # (R, HW)

    # Zero-padded flat image built as a register value (aligned lane concat:
    # OFF and the halo widths are multiples of 128 here) -- no scratch stores,
    # no padded copy in HBM.
    qv = jnp.concatenate(
        [jnp.zeros((R, OFF), jnp.float32),
         x_all,
         jnp.zeros((R, LQ - OFF - HW), jnp.float32)], axis=1)    # (R, LQ)

    # W-boundary validity from iota (no HBM mask input).  OFF % W == 0, so
    # lane % W is the true image column everywhere in the slab.
    lane = jax.lax.broadcasted_iota(jnp.int32, (1, LQ), 1)
    col = (lane & (W - 1)) if (W & (W - 1)) == 0 else jax.lax.rem(lane, W)

    # The 5 distinct W shifts, materialised ONCE via XLU roll + mask.  The
    # circular wrap only moves halo zeros (both slab ends hold >= 4 zeros),
    # and the wrapped columns are mask-zeroed anyway.
    shifted = []
    for kw in range(5):
        dw = 2 * kw - 4
        if dw == 0:
            shifted.append(qv)
        else:
            shift = ((-dw) if roll_like_jnp else dw) % LQ
            s = pltpu.roll(qv, shift=shift, axis=1)              # shifted[i] = qv[i+dw]
            m = ((col + dw >= 0) & (col + dw < W)).astype(jnp.float32)
            shifted.append(s * m)

    # Hoisted tap-weight loads (one load each; per-tap column slices of values).
    w3 = w3dw_ref[...]                                           # (R, 9)
    w5 = w5dw_ref[...]                                           # (R, 25)

    # Fused dilated 3x3 + 5x5 depthwise taps: the 3x3 offsets are a subset of
    # the 5x5 offsets, so every shifted slice feeds both accumulators.
    acc3 = jnp.zeros((R, HW), jnp.float32)
    acc5 = jnp.zeros((R, HW), jnp.float32)
    for kh in range(5):
        base = OFF + (2 * kh - 4) * W
        for kw in range(5):
            v = shifted[kw][:, base:base + HW]                   # (R, HW)
            k5 = kh * 5 + kw
            acc5 = acc5 + v * w5[:, k5:k5 + 1]                   # per-row splat
            if 1 <= kh <= 3 and 1 <= kw <= 3:
                k3 = (kh - 1) * 3 + (kw - 1)
                acc3 = acc3 + v * w3[:, k3:k3 + 1]

    # ONE fused pointwise matmul on the (otherwise idle) MXU: block-diagonal
    # over the batch block, bias folded via the ones block (K = 3R + 8),
    # N = HW lane-dense, output store aligned and unmasked.
    # TODO(synk): cast tap/matmul operands to bf16 (f32 accumulate) on
    # v6e/v7x for production channel counts; kept f32 here (v5e + 1e-3 check).
    rhs = jnp.concatenate(
        [x_all, acc3, acc5, jnp.ones((8, HW), jnp.float32)], axis=0)
    out = jnp.dot(wbig_ref[...], rhs, preferred_element_type=jnp.float32)
    out_ref[...] = out.astype(out_ref.dtype)


# ---------------------------------------------------------------------------
# Wrapper
# ---------------------------------------------------------------------------
def multi_scale_dilated(x_nchw, params):
    """x_nchw: (N, Cin, H, W) float32. Returns (N, Cout, H, W) float32."""
    N, Cin, H, W = map(int, x_nchw.shape)
    Cout = int(params['w1'].shape[0])
    HW = H * W

    # Batch block: smallest divisor of N that fills the 8-sublane axis
    # (B_blk*Cin % 8 == 0) -> ~2x on the VALU-bound tap loop for Cin=4 --
    # while keeping as many grid steps as possible.
    # TODO(synk): for production N also keep grid >= #TensorCores (2 on v7x).
    B_blk = N
    for d in range(1, N + 1):
        if N % d == 0 and (d * Cin) % 8 == 0:
            B_blk = d
            break
    R = B_blk * Cin

    # Flat geometry: image lives at lane offset OFF inside a length-LQ slab.
    # OFF is a multiple of 128 (aligned concat pieces) and of W (so the
    # in-kernel lane%W column mask lines up), and >= 4*W (top halo).
    step = int(np.lcm(128, W))
    OFF = step * max(1, -(-(4 * W) // step))
    LQ = -(-(OFF + (H + 4) * W + 4) // 128) * 128

    # Free metadata-only reshape of row-major NCHW: no transpose/pad in HBM.
    x_flat = x_nchw.reshape(N * Cin, HW)

    # ---- tiny parameter prep (O(channels^2)) --------------------------------
    w3dw = jnp.tile(params['w3dw'].reshape(Cin, 9).astype(jnp.float32), (B_blk, 1))
    w5dw = jnp.tile(params['w5dw'].reshape(Cin, 25).astype(jnp.float32), (B_blk, 1))
    # Fully folded bias: b1 + b3p + b5p + w3p@b3dw + w5p@b5dw.
    b_eff = (params['b1'] + params['b3p'] + params['b5p']
             + params['w3p'] @ params['b3dw']
             + params['w5p'] @ params['b5dw'])
    # Block-diagonal fused pointwise weight over the batch block; the last 8
    # columns pair with the ones block in the RHS (bias lives in column 3R).
    wbig = jnp.zeros((B_blk * Cout, 3 * R + 8), jnp.float32)
    for b in range(B_blk):
        ro, co = b * Cout, b * Cin
        wbig = wbig.at[ro:ro + Cout, co:co + Cin].set(params['w1'])
        wbig = wbig.at[ro:ro + Cout, R + co:R + co + Cin].set(params['w3p'])
        wbig = wbig.at[ro:ro + Cout, 2 * R + co:2 * R + co + Cin].set(params['w5p'])
        wbig = wbig.at[ro:ro + Cout, 3 * R].set(b_eff)

    kernel = functools.partial(_msm_kernel, H=H, W=W, OFF=OFF, LQ=LQ,
                               roll_like_jnp=_roll_matches_jnp_roll())

    # TODO(synk): for production H/W/C add an H-tile grid axis with an 8-row
    # halo, sized so the 5 live shifted slabs fit v7x's 64 MiB VMEM (32 MiB
    # scoped default); mark it "parallel" alongside the batch axis.
    out_flat = pl.pallas_call(
        kernel,
        out_shape=jax.ShapeDtypeStruct((N * Cout, HW), jnp.float32),
        grid=(N // B_blk,),
        in_specs=[
            pl.BlockSpec((R, HW), lambda n: (n, 0)),
            pl.BlockSpec((R, 9), lambda n: (0, 0)),
            pl.BlockSpec((R, 25), lambda n: (0, 0)),
            pl.BlockSpec((B_blk * Cout, 3 * R + 8), lambda n: (0, 0)),
        ],
        out_specs=pl.BlockSpec((B_blk * Cout, HW), lambda n: (n, 0)),
        compiler_params=pltpu.CompilerParams(
            dimension_semantics=("parallel",)),
    )(x_flat, w3dw, w5dw, wbig)

    return out_flat.reshape(N, Cout, H, W)


# ---------------------------------------------------------------------------
# Parameters / reference
# ---------------------------------------------------------------------------
def make_params(key, cin, cout):
    """Deterministic synthetic parameters in PyTorch-canonical shapes."""
    ks = jax.random.split(key, 10)
    s = 0.1
    return dict(
        w1=jax.random.normal(ks[0], (cout, cin), jnp.float32) * s,      # (Cout,Cin)
        b1=jax.random.normal(ks[1], (cout,), jnp.float32) * s,
        w3dw=jax.random.normal(ks[2], (cin, 3, 3), jnp.float32) * s,    # depthwise 3x3
        b3dw=jax.random.normal(ks[3], (cin,), jnp.float32) * s,
        w3p=jax.random.normal(ks[4], (cout, cin), jnp.float32) * s,
        b3p=jax.random.normal(ks[5], (cout,), jnp.float32) * s,
        w5dw=jax.random.normal(ks[6], (cin, 5, 5), jnp.float32) * s,    # depthwise 5x5
        b5dw=jax.random.normal(ks[7], (cin,), jnp.float32) * s,
        w5p=jax.random.normal(ks[8], (cout, cin), jnp.float32) * s,
        b5p=jax.random.normal(ks[9], (cout,), jnp.float32) * s,
    )


def reference(x, params):
    """Pure-JAX reference mirroring the PyTorch forward (NCHW)."""
    Cin = x.shape[1]
    Cout = params['w1'].shape[0]
    dn = ('NCHW', 'OIHW', 'NCHW')

    def pointwise(v, w, b):
        return lax.conv_general_dilated(
            v, w.reshape(Cout, Cin, 1, 1), (1, 1), [(0, 0), (0, 0)],
            dimension_numbers=dn) + b.reshape(1, Cout, 1, 1)

    def depthwise(v, w, b, pad):
        k = w.shape[-1]
        return lax.conv_general_dilated(
            v, w.reshape(Cin, 1, k, k), (1, 1), [(pad, pad), (pad, pad)],
            rhs_dilation=(2, 2), dimension_numbers=dn,
            feature_group_count=Cin) + b.reshape(1, Cin, 1, 1)

    out = pointwise(x, params['w1'], params['b1'])
    out = out + pointwise(depthwise(x, params['w3dw'], params['b3dw'], 2),
                          params['w3p'], params['b3p'])
    out = out + pointwise(depthwise(x, params['w5dw'], params['b5dw'], 4),
                          params['w5p'], params['b5p'])
    return out


if __name__ == "__main__":
    key = jax.random.PRNGKey(0)
    kx, kp = jax.random.split(key)

    N, Cin, Cout, H, W = 2, 4, 8, 16, 16
    x = jax.random.normal(kx, (N, Cin, H, W), jnp.float32)
    params = make_params(kp, Cin, Cout)

    out = jax.block_until_ready(multi_scale_dilated(x, params))
    ref = jax.block_until_ready(reference(x, params))

    assert out.shape == (N, Cout, H, W)
    maxerr = jnp.max(jnp.abs(out - ref))
    assert jnp.allclose(out, ref, rtol=1e-3, atol=1e-3), f"max abs err {maxerr}"

    print("KERNEL_OK")
</pallas_src>

<mosaic_0001>
module attributes {stable_mosaic.version = 11 : i64} {
  func.func @probe(%arg0: memref<8x128xf32, #tpu.memory_space<vmem>>, %arg1: memref<8x128xf32, #tpu.memory_space<vmem>>) attributes {dimension_semantics = [], scalar_prefetch = 0 : i64, scratch_operands = 0 : i64, tpu.core_type = #tpu.core_type<tc>} {
    %c0 = arith.constant 0 : index
    %c0_0 = arith.constant 0 : index
    %0 = vector.load %arg0[%c0, %c0_0] : memref<8x128xf32, #tpu.memory_space<vmem>>, vector<8x128xf32>
    %c1_i32 = arith.constant 1 : i32
    %1 = tpu.dynamic_rotate %0 by %c1_i32 dim 1 : vector<8x128xf32>, i32 -> vector<8x128xf32>
    %c0_1 = arith.constant 0 : index
    %c0_2 = arith.constant 0 : index
    %2 = vector.load %arg1[%c0_1, %c0_2] : memref<8x128xf32, #tpu.memory_space<vmem>>, vector<8x128xf32>
    tpu.vector_store %arg1[%c0_1, %c0_2], %1 {strides = array<i32>} : memref<8x128xf32, #tpu.memory_space<vmem>>, vector<8x128xf32>,
    return
  }
}

</mosaic_0001>

<llo_original>
// kernel: tpu_custom_call.1
$region0: #{tpu_custom_call.1}
  #allocation0 [shape = 'u32[]', space=smem, size = 0x4, offset = 0x4, fixed_abs, tag = 'smem constant byte address 0x4 - core index']
  #allocation1 [shape = 'u32[72,128]{1,0:T(1,128)}', space=vmem, size = 0x9000, scoped, tag = 'internal scratch']
  %s0 = inlined_call_operand.hbm [shape: f32[8,128], index: 0, kind: input, shape index: {}]
  %s1 = inlined_call_operand.hbm [shape: f32[8,128], index: 1, kind: output, shape index: {}]
  %s2 = sld [smem:[#allocation0]]
  $region18: #{tpu_custom_call.1} parent=0
    _
  %s4 = ssub.s32 1, %s2
  %s5 = scalar_select 0, %s4, %s2
  $region1: #{tpu_custom_call.1} parent=0
    #allocation2 [shape = 'u8[4096]{0}', space=vmem, size = 0x1000, scoped, tag = 'input window, operand 0, single buffered']
    #allocation3 [shape = 's32[1]{0}', space=sflag, size = 0x4, scoped, tag = 'scoped memory for tpu_custom_call.1']
    #allocation4 [shape = 's32[1]{0}', space=sflag, size = 0x4, scoped, tag = 'scoped memory for tpu_custom_call.1']
    #allocation5 [shape = 'u8[4096]{0}', space=vmem, size = 0x1000, scoped, tag = 'output window, operand 0, single buffered']
    %6 = vsyncpa [#allocation3], 0
    %7 = vsyncpa [#allocation4], 0
    // Predicated region
    $region2: #{tpu_custom_call.1} parent=1 // pred_check
      _
    $region3: #{tpu_custom_call.1} parent=1 // pred_check_branch
      %9 = sbr.rel (0) target = $region5
    $region4: #{tpu_custom_call.1} parent=1 // pred_region
      %11 = vsyncadd [#allocation3], 0
      %s13 = sshll.u32 %s0, 4
      %s14 = int_to_ptr.hbm [resolvable:$true] %s13
      %s15 = sshll.u32 [#allocation2], 4
      %s16 = int_to_ptr.vmem [resolvable:$true] %s15
      %18 = dma.hbm_to_vmem [thread:$0]  %s14, 128, %s16, [#allocation3]
    $region5: #{tpu_custom_call.1} parent=1 // pred_fallthru
      _
    // Predicated region
    $region6: #{tpu_custom_call.1} parent=1 // pred_check
      _
    $region7: #{tpu_custom_call.1} parent=1 // pred_check_branch
      %20 = sbr.rel (0) target = $region9
    $region8: #{tpu_custom_call.1} parent=1 // pred_region
      %22 = dma.done [#allocation3], 128
    $region9: #{tpu_custom_call.1} parent=1 // pred_fallthru
      _
    %v23 = vld [vmem:[#allocation2] sm:$0xff]
    %24 = vrot.lane.b32.xlu0 %v23, 1
    %v25 = vpop.permute.xlu0 %24
    %26 = vst [vmem:[#allocation5] sm:$0xff] %v25
    // Predicated region
    $region10: #{tpu_custom_call.1} parent=1 // pred_check
      _
    $region11: #{tpu_custom_call.1} parent=1 // pred_check_branch
      %28 = sbr.rel (0) target = $region13
    $region12: #{tpu_custom_call.1} parent=1 // pred_region
      %30 = vsyncadd [#allocation4], 0
      %s32 = sshll.u32 [#allocation5], 4
      %s33 = int_to_ptr.vmem [resolvable:$true] %s32
      %s34 = sshll.u32 %s1, 4
      %s35 = int_to_ptr.hbm [resolvable:$true] %s34
      %37 = dma.vmem_to_hbm [thread:$0]  %s33, 128, %s35, [#allocation4]
    $region13: #{tpu_custom_call.1} parent=1 // pred_fallthru
      _
    // Predicated region
    $region14: #{tpu_custom_call.1} parent=1 // pred_check
      _
    $region15: #{tpu_custom_call.1} parent=1 // pred_check_branch
      %39 = sbr.rel (0) target = $region17
    $region16: #{tpu_custom_call.1} parent=1 // pred_region
      %41 = dma.done [#allocation4], 128
    $region17: #{tpu_custom_call.1} parent=1 // pred_fallthru
      _
    %42 = vsyncpa [#allocation3], 1
    %43 = vsyncpa [#allocation4], 1

</llo_original>
